<compile_context>
chip_gen: v6e
topology: v6e:2x2x1
jax: 0.10.0
libtpu: 0.0.40
codegen_flags: <defaults>
</compile_context>

<pallas_src>
import functools

import jax
import jax.numpy as jnp
from jax.experimental import pallas as pl
from jax.experimental.pallas import tpu as pltpu


_LANE_CANDIDATES = (4096, 2048, 1024, 512, 256, 128)


@functools.lru_cache(maxsize=1)
def _gen_config():
    """(block_bytes, vmem_limit_bytes, min_grid_steps, native_bf16_compute)."""
    try:
        kind = jax.devices()[0].device_kind.lower()
    except Exception:
        kind = ""
    if "v5" in kind:            # v5e/v5p: ~0.8 TB/s HBM, no bf16 VPU/EUP
        return 2 * 1024 * 1024, 32 * 1024 * 1024, 4, False
    if "v6" in kind:            # v6e: ~1.4 TB/s HBM, 128 MiB physical VMEM
        return 4 * 1024 * 1024, 64 * 1024 * 1024, 4, True
    if "7" in kind:             # v7x: ~3.2 TB/s HBM, 64 MiB VMEM, 2 TensorCores
        return 8 * 1024 * 1024, 48 * 1024 * 1024, 8, True
    return 4 * 1024 * 1024, 48 * 1024 * 1024, 4, False   # unknown: conservative


def _mul_act_kernel(ratio_ref, x_ref, o_ref, *, compute_f32: bool):
    # ratio_ref: (1, 1) f32 scalar living in SMEM.
    r = ratio_ref[0, 0]
    x = x_ref[...]
    if compute_f32:
        y = jnp.tanh(x.astype(jnp.float32) * r)          # VPU mul + EUP tanh in f32
    else:
        # Native low-precision compute (v6e/v7x): keeps bf16 packed as [16,128] vregs.
        y = jnp.tanh(x * r.astype(x.dtype))
    o_ref[...] = y.astype(o_ref.dtype)


def _run_flat(x_flat: jax.Array, ratio: jax.Array) -> jax.Array:
    """Pallas path for a flat array whose length is a multiple of 128."""
    total = x_flat.shape[0]
    dtype = x_flat.dtype
    itemsize = jnp.dtype(dtype).itemsize
    block_bytes, vmem_limit, min_grid, native_bf16 = _gen_config()

    # Lane-dense width: largest multiple-of-128 divisor of `total`.
    lane = next(c for c in _LANE_CANDIDATES if total % c == 0)
    rows = total // lane
    x2d = jnp.reshape(x_flat, (rows, lane))

    # Row-tile granularity = sublane packing for this dtype (8 f32 rows / 16 bf16 rows).
    sub = 8 * max(1, 4 // itemsize)
    rows_per_block = max(sub, (block_bytes // (lane * itemsize)) // sub * sub)

    if rows <= sub:
        tile_r = rows                          # full-extent block (always legal)
    else:
        # Aim for >= min_grid pipelined steps so DMA/compute overlap engages (and
        # both v7x TensorCores get work), capped by the HBM-friendly block size.
        desired = max(sub, (pl.cdiv(rows, min_grid) // sub) * sub)
        tile_r = min(rows_per_block, desired)
    grid_r = pl.cdiv(rows, tile_r)             # partial last block handled by Pallas

    compute_f32 = not (native_bf16 and dtype == jnp.bfloat16)
    kernel = functools.partial(_mul_act_kernel, compute_f32=compute_f32)

    ratio_smem = jnp.reshape(ratio.astype(jnp.float32), (1, 1))

    out2d = pl.pallas_call(
        kernel,
        out_shape=jax.ShapeDtypeStruct((rows, lane), dtype),
        grid=(grid_r,),
        in_specs=[
            pl.BlockSpec(memory_space=pltpu.SMEM),            # scalar ratio, untiled
            pl.BlockSpec((tile_r, lane), lambda i: (i, 0)),   # pipelined input tile
        ],
        out_specs=pl.BlockSpec((tile_r, lane), lambda i: (i, 0)),
        # TODO(synk): confirm via xprof that "parallel" shards the grid across both
        # v7x TensorCores; if not, move to pltpu.CORE_PARALLEL / pl.core_map.
        compiler_params=pltpu.CompilerParams(
            dimension_semantics=("parallel",),
            vmem_limit_bytes=vmem_limit,
        ),
        cost_estimate=pl.CostEstimate(
            flops=total,
            transcendentals=total,
            bytes_accessed=2 * total * itemsize,
        ),
    )(ratio_smem, x2d)

    return jnp.reshape(out2d, (total,))


def multiplied_activation(x: jax.Array, ratio: jax.Array) -> jax.Array:
    """forward(x) = tanh(x * ratio). x: arbitrary shape; ratio: shape (1,) f32."""
    orig_shape = x.shape
    total = x.size
    dtype = x.dtype
    x_flat = jnp.reshape(x, (total,))
    r_scalar = jnp.reshape(ratio.astype(jnp.float32), ())

    if total % 128 == 0:
        out_flat = _run_flat(x_flat, ratio)
    else:
        # Ragged fallback: kernel over the 128-divisible prefix, plain-JAX tail
        # (< 128 elements).  Avoids the old pad + slice extra HBM passes.
        main = (total // 128) * 128
        if main == 0:
            # Degenerate tiny input — pure JAX is already optimal here.
            out_flat = jnp.tanh(x_flat.astype(jnp.float32) * r_scalar).astype(dtype)
        else:
            head = _run_flat(x_flat[:main], ratio)
            tail = jnp.tanh(
                x_flat[main:].astype(jnp.float32) * r_scalar).astype(dtype)
            out_flat = jnp.concatenate([head, tail])

    return jnp.reshape(out_flat, orig_shape)


if __name__ == "__main__":
    key = jax.random.PRNGKey(0)
    k1, k2, k3, k4 = jax.random.split(key, 4)

    # Deterministic parameter init: ratio = 2.0 (trainable scalar in torch).
    ratio = jnp.array([2.0], dtype=jnp.float32)

    # Small NCHW input consistent with the module's typical use.
    x = jax.random.normal(key, (2, 4, 16, 16), dtype=jnp.float32)
    out = jax.block_until_ready(multiplied_activation(x, ratio))
    ref = jnp.tanh(x * ratio[0])
    assert out.shape == x.shape and out.dtype == x.dtype
    assert float(jnp.max(jnp.abs(out - ref))) < 1e-6

    # Large tensor: multi-tile pipelined grid path.
    x_big = jax.random.normal(k1, (8, 8, 128, 128), dtype=jnp.float32)
    out_big = jax.block_until_ready(multiplied_activation(x_big, ratio))
    assert float(jnp.max(jnp.abs(out_big - jnp.tanh(x_big * ratio[0])))) < 1e-6

    # Mid-sized tensor whose row count is NOT a multiple of the row tile:
    # exercises the cdiv-grid partial-last-block path and the min-grid logic.
    x_mid = jax.random.normal(k2, (36, 64, 64), dtype=jnp.float32)
    out_mid = jax.block_until_ready(multiplied_activation(x_mid, ratio))
    assert float(jnp.max(jnp.abs(out_mid - jnp.tanh(x_mid * ratio[0])))) < 1e-6

    # Ragged fallback (element count not a multiple of 128): prefix kernel + jnp tail.
    x_rag = jax.random.normal(k3, (3, 5, 7, 11), dtype=jnp.float32)
    out_rag = jax.block_until_ready(multiplied_activation(x_rag, ratio))
    assert out_rag.shape == x_rag.shape
    assert float(jnp.max(jnp.abs(out_rag - jnp.tanh(x_rag * ratio[0])))) < 1e-6

    # bf16 path (native bf16 compute on v6e/v7x, f32 compute elsewhere).
    x_bf = jax.random.normal(k4, (4, 8, 32, 32), dtype=jnp.float32).astype(jnp.bfloat16)
    out_bf = jax.block_until_ready(multiplied_activation(x_bf, ratio))
    assert out_bf.shape == x_bf.shape and out_bf.dtype == jnp.bfloat16
    ref_bf = jnp.tanh(x_bf.astype(jnp.float32) * ratio[0])
    assert float(jnp.max(jnp.abs(out_bf.astype(jnp.float32) - ref_bf))) < 5e-2

    print("KERNEL_OK")
</pallas_src>

<mosaic_0001>
module attributes {stable_mosaic.version = 11 : i64} {
  func.func @_mul_act_kernel(%arg0: i32, %arg1: memref<1x1xf32, #tpu.memory_space<smem>>, %arg2: memref<1x2048xf32, #tpu.memory_space<vmem>>, %arg3: memref<1x2048xf32, #tpu.memory_space<vmem>>) attributes {dimension_semantics = [#tpu.dimension_semantics<parallel>], iteration_bounds = array<i64: 1>, scalar_prefetch = 0 : i64, scratch_operands = 0 : i64, tpu.core_type = #tpu.core_type<tc>, window_params = [{transform_indices = @transform_0, window_bounds = array<i64: 1, 1>}, {transform_indices = @transform_1, window_bounds = array<i64: 1, 2048>}, {transform_indices = @transform_2, window_bounds = array<i64: 1, 2048>}]} {
    %c0 = arith.constant 0 : index
    %c0_0 = arith.constant 0 : index
    %0 = memref.load %arg1[%c0, %c0_0] : memref<1x1xf32, #tpu.memory_space<smem>>
    %c0_1 = arith.constant 0 : index
    %c0_2 = arith.constant 0 : index
    %1 = vector.load %arg2[%c0_1, %c0_2] : memref<1x2048xf32, #tpu.memory_space<vmem>>, vector<1x2048xf32>
    %2 = vector.broadcast %0 : f32 to vector<1x2048xf32>
    %3 = arith.mulf %1, %2 : vector<1x2048xf32>
    %4 = math.tanh %3 : vector<1x2048xf32>
    %c0_3 = arith.constant 0 : index
    %c0_4 = arith.constant 0 : index
    %5 = vector.load %arg3[%c0_3, %c0_4] : memref<1x2048xf32, #tpu.memory_space<vmem>>, vector<1x2048xf32>
    tpu.vector_store %arg3[%c0_3, %c0_4], %4 {strides = array<i32>} : memref<1x2048xf32, #tpu.memory_space<vmem>>, vector<1x2048xf32>,
    return
  }
  func.func @transform_0(%arg0: i32) -> (i32, i32) {
    %c0_i32 = arith.constant 0 : i32
    %c0_i32_0 = arith.constant 0 : i32
    %c0_i32_1 = arith.constant 0 : i32
    return %c0_i32, %c0_i32_0 : i32, i32
  }
  func.func @transform_1(%arg0: i32) -> (i32, i32) {
    %c0_i32 = arith.constant 0 : i32
    %c0_i32_0 = arith.constant 0 : i32
    return %arg0, %c0_i32 : i32, i32
  }
  func.func @transform_2(%arg0: i32) -> (i32, i32) {
    %c0_i32 = arith.constant 0 : i32
    %c0_i32_0 = arith.constant 0 : i32
    return %arg0, %c0_i32 : i32, i32
  }
}

</mosaic_0001>

<llo_original>
// kernel: tpu_custom_call.1
$region0: #{tpu_custom_call.1}
  #allocation0 [shape = 'u32[]', space=smem, size = 0x4, offset = 0x4, fixed_abs, tag = 'smem constant byte address 0x4 - core index']
  #allocation1 [shape = 'u32[144,128]{1,0:T(1,128)}', space=vmem, size = 0x12000, scoped, tag = 'internal scratch']
  #allocation2 [shape = 'f32[1,1]{1,0:T(1,128)S(6)}', space=smem, size = 0x200, scoped, tag = 'scoped memory for tpu_custom_call.1']
  %s0 = inlined_call_operand.<no memory space> [shape: f32[1,1], index: 0, kind: input, shape index: {}]
  %s1 = inlined_call_operand.hbm [shape: f32[1,2048], index: 1, kind: input, shape index: {}]
  %s2 = inlined_call_operand.hbm [shape: f32[1,2048], index: 2, kind: output, shape index: {}]
  %s3 = sld [smem:[#allocation0]]
  $region22: #{tpu_custom_call.1} parent=0
    _
  %s5 = ssub.s32 1, %s3
  %s6 = scalar_select 0, %s5, %s3
  %7 = sst [smem:[#allocation2]] %s0
  $region1: #{tpu_custom_call.1} parent=0
    #allocation3 [shape = 'u8[8192]{0}', space=vmem, size = 0x2000, scoped, tag = 'input window, operand 1, single buffered']
    #allocation4 [shape = 's32[1]{0}', space=sflag, size = 0x4, scoped, tag = 'scoped memory for tpu_custom_call.1']
    #allocation5 [shape = 's32[1]{0}', space=sflag, size = 0x4, scoped, tag = 'scoped memory for tpu_custom_call.1']
    #allocation6 [shape = 'u8[8192]{0}', space=vmem, size = 0x2000, scoped, tag = 'output window, operand 0, single buffered']
    %8 = vsyncpa [#allocation4], 0
    %9 = vsyncpa [#allocation5], 0
    // Predicated region
    $region2: #{tpu_custom_call.1} parent=1 // pred_check
      _
    $region3: #{tpu_custom_call.1} parent=1 // pred_check_branch
      %11 = sbr.rel (0) target = $region5
    $region4: #{tpu_custom_call.1} parent=1 // pred_region
      _
    $region5: #{tpu_custom_call.1} parent=1 // pred_fallthru
      _
    // Predicated region
    $region6: #{tpu_custom_call.1} parent=1 // pred_check
      _
    $region7: #{tpu_custom_call.1} parent=1 // pred_check_branch
      %13 = sbr.rel (0) target = $region9
    $region8: #{tpu_custom_call.1} parent=1 // pred_region
      %s15 = ssub.s32 256, 256
      %16 = vsyncadd [#allocation4], %s15
      %s18 = sshll.u32 [#allocation3], 4
      %s19 = int_to_ptr.vmem [resolvable:$true] %s18
      %21 = dma.hbm_to_vmem [thread:$0]  %s1, 256, %s19, [#allocation4]
    $region9: #{tpu_custom_call.1} parent=1 // pred_fallthru
      _
    // Predicated region
    $region10: #{tpu_custom_call.1} parent=1 // pred_check
      _
    $region11: #{tpu_custom_call.1} parent=1 // pred_check_branch
      %23 = sbr.rel (0) target = $region13
    $region12: #{tpu_custom_call.1} parent=1 // pred_region
      %24 = dma.done [#allocation4], 256
    $region13: #{tpu_custom_call.1} parent=1 // pred_fallthru
      _
    %s25 = sld [smem:[#allocation2]]
    %v26 = vld [vmem:[#allocation3] sm:$0xff]
    %v27 = vld [vmem:[#allocation3 + $0x8] sm:$0xff]
    %v28 = vstv %s25
    %v29 = vmul.f32 %v26, %v28
    %v30 = vmul.f32 %v27, %v28
    %v31 = vtanh.pop %v29
    %v32 = vtanh.pop %v30
    %33 = vst [vmem:[#allocation6] sm:$0xff] %v31
    %34 = vst [vmem:[#allocation6 + $0x8] sm:$0xff] %v32
    // Predicated region
    $region14: #{tpu_custom_call.1} parent=1 // pred_check
      _
    $region15: #{tpu_custom_call.1} parent=1 // pred_check_branch
      %36 = sbr.rel (0) target = $region17
    $region16: #{tpu_custom_call.1} parent=1 // pred_region
      %s38 = ssub.s32 256, 256
      %39 = vsyncadd [#allocation5], %s38
      %s41 = sshll.u32 [#allocation6], 4
      %s42 = int_to_ptr.vmem [resolvable:$true] %s41
      %44 = dma.vmem_to_hbm [thread:$0]  %s42, 256, %s2, [#allocation5]
    $region17: #{tpu_custom_call.1} parent=1 // pred_fallthru
      _
    // Predicated region
    $region18: #{tpu_custom_call.1} parent=1 // pred_check
      _
    $region19: #{tpu_custom_call.1} parent=1 // pred_check_branch
      %46 = sbr.rel (0) target = $region21
    $region20: #{tpu_custom_call.1} parent=1 // pred_region
      %47 = dma.done [#allocation5], 256
    $region21: #{tpu_custom_call.1} parent=1 // pred_fallthru
      _
    %48 = vsyncpa [#allocation4], 1
    %49 = vsyncpa [#allocation5], 1

</llo_original>
